<compile_context>
chip_gen: v6e
topology: v6e:2x2x1
jax: 0.10.0
libtpu: 0.0.40
codegen_flags: <defaults>
</compile_context>

<pallas_src>
import jax
import jax.numpy as jnp
from jax.experimental import pallas as pl
from jax.experimental.pallas import tpu as pltpu


def _round_up(n, m):
    return ((n + m - 1) // m) * m


def _final_layer_kernel(x_ref, c_ref, w_ada_ref, b_ada_ref,
                        w_lin_ref, b_lin_ref, o_ref):
    """One row-tile of the FinalLayer forward.

    x_ref, c_ref : (tm, H)
    w_ada_ref    : (H, 2H)  fused [shift | scale] projection (pre-transposed)
    b_ada_ref    : (1, 2H)  f32, scale half already has +1 folded in
    w_lin_ref    : (H, Pp)  output projection, lane-padded so Pp % 128 == 0
    b_lin_ref    : (1, Pp)
    o_ref        : (tm, Pp)
    """
    H = x_ref.shape[-1]

    # ---- adaLN_modulation = Linear(SiLU(c)); fused shift/scale matmul ------
    c32 = c_ref[...].astype(jnp.float32)
    c_act = (c32 * jax.nn.sigmoid(c32)).astype(w_ada_ref.dtype)
    ada = jnp.dot(c_act, w_ada_ref[...], preferred_element_type=jnp.float32)
    ada = ada + b_ada_ref[...]                      # bias kept in f32

    # ---- LayerNorm stats: single pass (E[x], E[x^2]) in f32 ----------------
    x = x_ref[...].astype(jnp.float32)
    mean = jnp.mean(x, axis=-1, keepdims=True)
    ex2 = jnp.mean(x * x, axis=-1, keepdims=True)
    var = ex2 - mean * mean
    xn = (x - mean) * jax.lax.rsqrt(var + 1e-6)

    # ---- modulate: xn * scale + shift ('+1' already folded into bias) ------
    # Run the modulate in the output-matmul feed dtype (bf16 on v6e/v7x
    # params) to cut vreg/VMEM pressure; keep f32 when weights are f32.
    mdt = w_lin_ref.dtype
    if mdt == jnp.float32:
        xm = xn * ada[:, H:] + ada[:, :H]
    else:
        xm = xn.astype(mdt) * ada[:, H:].astype(mdt) + ada[:, :H].astype(mdt)

    # ---- final linear projection -------------------------------------------
    out = jnp.dot(xm.astype(mdt), w_lin_ref[...],
                  preferred_element_type=jnp.float32)
    out = out + b_lin_ref[...].astype(jnp.float32)
    o_ref[...] = out.astype(o_ref.dtype)


def _resident_spec(shape):
    """BlockSpec for a grid-invariant operand: single-buffered, one DMA."""
    idx = lambda i: (0, 0)
    try:
        return pl.BlockSpec(shape, idx, pipeline_mode=pl.Buffered(1))
    except (AttributeError, TypeError):   # older JAX without pipeline_mode
        return pl.BlockSpec(shape, idx)


def final_layer_forward(x, c, params, *, tm=512):
    """x, c: (B, T, H). params: fused, pre-transposed weights (init_params).

    The conditioning c is per-token ((B, T, H), chunked along dim=2), so
    shift/scale genuinely must be computed per token.
    """
    B, T, H = x.shape
    w_ada, b_ada = params["w_ada"], params["b_ada"]           # (H, 2H), (1, 2H)
    w_lin, b_lin = params["w_lin"], params["b_lin"]           # (H, P),  (1, P)
    P = w_lin.shape[1]

    # Fold the '+1' of modulate into the scale half of the adaLN bias; keep
    # the folded bias in f32 so the kernel adds it at accumulator precision.
    b_ada_f = b_ada.astype(jnp.float32).at[:, H:].add(1.0)

    # Lane-dense output: pad the projection output dim to a multiple of 128
    # so every per-tile store is an unmasked full-lane vst.
    Pp = _round_up(max(P, 1), 128)
    if Pp != P:
        w_lin = jnp.pad(w_lin, ((0, 0), (0, Pp - P)))
        b_lin = jnp.pad(b_lin, ((0, 0), (0, Pp - P)))

    # ---- row tiling ---------------------------------------------------------
    itemsize = jnp.dtype(x.dtype).itemsize
    w_itemsize = jnp.dtype(w_ada.dtype).itemsize
    sub = 8 * max(1, 4 // itemsize)        # sublane packing: 8 f32, 16 bf16, 32 i8
    N = B * T
    tm = _round_up(max(int(tm), sub), 256)  # big tiles fill the MXU M dimension
    if N <= tm:
        if N >= 512:
            # enough rows to split: 2 grid steps so v7x's second TC gets work
            tm = _round_up((N + 1) // 2, sub)
        else:
            tm = _round_up(max(N, sub), sub)  # single step, no padded-tail waste

    # ---- VMEM budget (generation-aware) -------------------------------------
    try:
        phys_vmem = int(pltpu.get_tpu_info().vmem_capacity_bytes)
    except Exception:
        phys_vmem = 128 << 20
    cap = int(phys_vmem * 0.85)            # ~15% headroom (≈54 MiB on v7x)

    def _footprint(tm_):
        tiles = 2 * tm_ * 2 * H * itemsize + 2 * tm_ * Pp * itemsize  # x,c,out x2 bufs
        weights = (H * 2 * H + H * Pp) * w_itemsize + (2 * H) * 4 + Pp * w_itemsize
        interm = tm_ * 2 * H * 4 + 3 * tm_ * H * 4 + tm_ * Pp * 4     # f32 temps
        return tiles + weights + interm + (4 << 20)

    while tm > 256 and _footprint(tm) > cap:
        tm = _round_up(tm // 2, sub)
    vmem_limit = int(min(max(_footprint(tm), 32 << 20), cap))
    # TODO(synk): at very large H (>= ~3072 bf16) on v7x even the single-
    # buffered (H, 2H) weight + tiles exceed ~48 MiB; add a K-tiled reduction
    # grid axis with a (tm, 2H) accumulator instead of shrinking tm.

    Np = _round_up(N, tm)
    x2 = x.reshape(N, H)
    c2 = c.reshape(N, H)
    if Np != N:
        x2 = jnp.pad(x2, ((0, Np - N), (0, 0)))
        c2 = jnp.pad(c2, ((0, Np - N), (0, 0)))

    grid = (Np // tm,)
    row_spec = pl.BlockSpec((tm, H), lambda i: (i, 0))
    out_spec = pl.BlockSpec((tm, Pp), lambda i: (i, 0))

    out2 = pl.pallas_call(
        _final_layer_kernel,
        out_shape=jax.ShapeDtypeStruct((Np, Pp), x.dtype),
        grid_spec=pltpu.PrefetchScalarGridSpec(
            num_scalar_prefetch=0,
            grid=grid,
            in_specs=[
                row_spec,                        # x rows (double-buffered)
                row_spec,                        # c rows (double-buffered)
                _resident_spec((H, 2 * H)),      # fused adaLN weight (1 buffer)
                _resident_spec((1, 2 * H)),      # fused adaLN bias  (+1 folded)
                _resident_spec((H, Pp)),         # output projection weight
                _resident_spec((1, Pp)),         # output projection bias
            ],
            out_specs=out_spec,
        ),
        compiler_params=pltpu.CompilerParams(
            dimension_semantics=("parallel",),
            vmem_limit_bytes=vmem_limit),
    )(x2, c2, w_ada, b_ada_f, w_lin, b_lin)

    return out2[:N, :P].reshape(B, T, P)


def init_params(key, hidden_size, patch_size, out_channels, dtype=jnp.float32):
    """Deterministic synthetic parameters matching FinalLayer.__init__ shapes,
    pre-transposed to (in, out) with the adaLN projection fused.

    For real DiT hidden sizes pass dtype=jnp.bfloat16: the kernel feeds the
    MXU in the weight dtype, so bf16 halves VMEM and avoids multi-pass f32
    MXU emulation on v5e/v6e (v7x MXU is bf16/fp8-native).
    """
    P = patch_size * patch_size * out_channels
    k1, k2, k3, k4 = jax.random.split(key, 4)
    # PyTorch layout: Linear(H, 2H).weight is (2H, H), bias (2H,);
    #                 Linear(H, P).weight is (P, H),  bias (P,).
    w_ada_t = jax.random.normal(k1, (2 * hidden_size, hidden_size), jnp.float32) * 0.02
    b_ada_t = jax.random.normal(k2, (2 * hidden_size,), jnp.float32) * 0.02
    w_lin_t = jax.random.normal(k3, (P, hidden_size), jnp.float32) * 0.02
    b_lin_t = jax.random.normal(k4, (P,), jnp.float32) * 0.02
    # Fused column order matches `.chunk(2, dim=2)`: shift = [:H], scale = [H:].
    return {
        "w_ada": w_ada_t.T.astype(dtype),                # (H, 2H)
        "b_ada": b_ada_t.reshape(1, -1).astype(dtype),   # (1, 2H)
        "w_lin": w_lin_t.T.astype(dtype),                # (H, P)
        "b_lin": b_lin_t.reshape(1, -1).astype(dtype),   # (1, P)
    }


def final_layer_ref(x, c, params):
    """Pure-JAX reference of the PyTorch forward for verification."""
    H = x.shape[-1]
    w_ada = params["w_ada"].astype(jnp.float32)
    b_ada = params["b_ada"][0].astype(jnp.float32)
    w_lin = params["w_lin"].astype(jnp.float32)
    b_lin = params["b_lin"][0].astype(jnp.float32)

    c_act = c * jax.nn.sigmoid(c)
    ada = c_act @ w_ada + b_ada
    shift, scale = ada[..., :H], ada[..., H:]
    mean = jnp.mean(x, axis=-1, keepdims=True)
    var = jnp.mean((x - mean) ** 2, axis=-1, keepdims=True)
    xn = (x - mean) / jnp.sqrt(var + 1e-6)
    xm = xn * (1.0 + scale) + shift
    return xm @ w_lin + b_lin


if __name__ == "__main__":
    hidden_size = 32
    patch_size = 2
    out_channels = 4
    B, T = 2, 8

    key = jax.random.PRNGKey(0)
    kx, kc, kp = jax.random.split(key, 3)
    x = jax.random.normal(kx, (B, T, hidden_size), jnp.float32)
    c = jax.random.normal(kc, (B, T, hidden_size), jnp.float32)
    params = init_params(kp, hidden_size, patch_size, out_channels)

    out = jax.block_until_ready(final_layer_forward(x, c, params))
    ref = final_layer_ref(x, c, params)

    assert out.shape == (B, T, patch_size * patch_size * out_channels)
    assert jnp.allclose(out, ref, atol=1e-4, rtol=1e-4), "mismatch vs reference"

    # TODO(synk): the `c is None` branch (shift=scale=0) is handled trivially
    # by callers passing zeros; not specialized into a second kernel.
    print("KERNEL_OK")
</pallas_src>

<mosaic_0001>
module attributes {stable_mosaic.version = 11 : i64} {
  func.func @_final_layer_kernel(%arg0: i32, %arg1: memref<16x32xf32, #tpu.memory_space<vmem>>, %arg2: memref<16x32xf32, #tpu.memory_space<vmem>>, %arg3: memref<32x64xf32, #tpu.memory_space<vmem>>, %arg4: memref<1x64xf32, #tpu.memory_space<vmem>>, %arg5: memref<32x128xf32, #tpu.memory_space<vmem>>, %arg6: memref<1x128xf32, #tpu.memory_space<vmem>>, %arg7: memref<16x128xf32, #tpu.memory_space<vmem>>) attributes {dimension_semantics = [#tpu.dimension_semantics<parallel>], iteration_bounds = array<i64: 1>, scalar_prefetch = 0 : i64, scratch_operands = 0 : i64, tpu.core_type = #tpu.core_type<tc>, window_params = [{transform_indices = @transform_0, window_bounds = array<i64: 16, 32>}, {transform_indices = @transform_1, window_bounds = array<i64: 16, 32>}, {pipeline_mode = #tpu.pipeline_mode<synchronous>, transform_indices = @transform_2, window_bounds = array<i64: 32, 64>}, {pipeline_mode = #tpu.pipeline_mode<synchronous>, transform_indices = @transform_3, window_bounds = array<i64: 1, 64>}, {pipeline_mode = #tpu.pipeline_mode<synchronous>, transform_indices = @transform_4, window_bounds = array<i64: 32, 128>}, {pipeline_mode = #tpu.pipeline_mode<synchronous>, transform_indices = @transform_5, window_bounds = array<i64: 1, 128>}, {transform_indices = @transform_6, window_bounds = array<i64: 16, 128>}]} {
    %c0 = arith.constant 0 : index
    %c0_0 = arith.constant 0 : index
    %0 = vector.load %arg2[%c0, %c0_0] : memref<16x32xf32, #tpu.memory_space<vmem>>, vector<16x32xf32>
    %1 = arith.negf %0 : vector<16x32xf32>
    %2 = math.exp %1 : vector<16x32xf32>
    %cst = arith.constant 1.000000e+00 : f32
    %3 = vector.broadcast %cst : f32 to vector<16x32xf32>
    %4 = arith.addf %3, %2 : vector<16x32xf32>
    %5 = arith.divf %3, %4 : vector<16x32xf32>
    %6 = arith.mulf %0, %5 : vector<16x32xf32>
    %c0_1 = arith.constant 0 : index
    %c0_2 = arith.constant 0 : index
    %7 = vector.load %arg3[%c0_1, %c0_2] : memref<32x64xf32, #tpu.memory_space<vmem>>, vector<32x64xf32>
    %cst_3 = arith.constant dense<0.000000e+00> : vector<16x64xf32>
    %8 = tpu.matmul %6, %7, %cst_3 {dimension_numbers = #tpu.dot_dimension_numbers<[1], [0], [0], [1], [0, 0, 1, 1], [], []>} : vector<16x32xf32>, vector<32x64xf32>, vector<16x64xf32> -> vector<16x64xf32>
    %c0_4 = arith.constant 0 : index
    %c0_5 = arith.constant 0 : index
    %9 = vector.load %arg4[%c0_4, %c0_5] : memref<1x64xf32, #tpu.memory_space<vmem>>, vector<1x64xf32>
    %10 = vector.broadcast %9 : vector<1x64xf32> to vector<16x64xf32>
    %11 = arith.addf %8, %10 : vector<16x64xf32>
    %c0_6 = arith.constant 0 : index
    %c0_7 = arith.constant 0 : index
    %12 = vector.load %arg1[%c0_6, %c0_7] : memref<16x32xf32, #tpu.memory_space<vmem>>, vector<16x32xf32>
    %cst_8 = arith.constant dense<0.000000e+00> : vector<16xf32>
    %13 = vector.multi_reduction <add>, %12, %cst_8 [1] : vector<16x32xf32> to vector<16xf32>
    %14 = vector.shape_cast %13 : vector<16xf32> to vector<16x1xf32>
    %cst_9 = arith.constant 3.200000e+01 : f32
    %15 = vector.broadcast %cst_9 : f32 to vector<16x1xf32>
    %16 = arith.divf %14, %15 : vector<16x1xf32>
    %17 = arith.mulf %12, %12 : vector<16x32xf32>
    %cst_10 = arith.constant dense<0.000000e+00> : vector<16xf32>
    %18 = vector.multi_reduction <add>, %17, %cst_10 [1] : vector<16x32xf32> to vector<16xf32>
    %19 = vector.shape_cast %18 : vector<16xf32> to vector<16x1xf32>
    %cst_11 = arith.constant 3.200000e+01 : f32
    %20 = vector.broadcast %cst_11 : f32 to vector<16x1xf32>
    %21 = arith.divf %19, %20 : vector<16x1xf32>
    %22 = arith.mulf %16, %16 : vector<16x1xf32>
    %23 = arith.subf %21, %22 : vector<16x1xf32>
    %24 = vector.broadcast %16 : vector<16x1xf32> to vector<16x32xf32>
    %25 = arith.subf %12, %24 : vector<16x32xf32>
    %cst_12 = arith.constant 9.99999997E-7 : f32
    %26 = vector.broadcast %cst_12 : f32 to vector<16x1xf32>
    %27 = arith.addf %23, %26 : vector<16x1xf32>
    %28 = math.rsqrt %27 : vector<16x1xf32>
    %29 = vector.broadcast %28 : vector<16x1xf32> to vector<16x32xf32>
    %30 = arith.mulf %25, %29 : vector<16x32xf32>
    %31 = vector.extract_strided_slice %11 {offsets = [0, 32], sizes = [16, 32], strides = [1, 1]} : vector<16x64xf32> to vector<16x32xf32>
    %32 = arith.mulf %30, %31 : vector<16x32xf32>
    %33 = vector.extract_strided_slice %11 {offsets = [0, 0], sizes = [16, 32], strides = [1, 1]} : vector<16x64xf32> to vector<16x32xf32>
    %34 = arith.addf %32, %33 : vector<16x32xf32>
    %c0_13 = arith.constant 0 : index
    %c0_14 = arith.constant 0 : index
    %35 = vector.load %arg5[%c0_13, %c0_14] : memref<32x128xf32, #tpu.memory_space<vmem>>, vector<32x128xf32>
    %cst_15 = arith.constant dense<0.000000e+00> : vector<16x128xf32>
    %36 = tpu.matmul %34, %35, %cst_15 {dimension_numbers = #tpu.dot_dimension_numbers<[1], [0], [0], [1], [0, 0, 1, 1], [], []>} : vector<16x32xf32>, vector<32x128xf32>, vector<16x128xf32> -> vector<16x128xf32>
    %c0_16 = arith.constant 0 : index
    %c0_17 = arith.constant 0 : index
    %37 = vector.load %arg6[%c0_16, %c0_17] : memref<1x128xf32, #tpu.memory_space<vmem>>, vector<1x128xf32>
    %38 = vector.broadcast %37 : vector<1x128xf32> to vector<16x128xf32>
    %39 = arith.addf %36, %38 : vector<16x128xf32>
    %c0_18 = arith.constant 0 : index
    %c0_19 = arith.constant 0 : index
    %40 = vector.load %arg7[%c0_18, %c0_19] : memref<16x128xf32, #tpu.memory_space<vmem>>, vector<16x128xf32>
    tpu.vector_store %arg7[%c0_18, %c0_19], %39 {strides = array<i32>} : memref<16x128xf32, #tpu.memory_space<vmem>>, vector<16x128xf32>,
    return
  }
  func.func @transform_0(%arg0: i32) -> (i32, i32) {
    %c0_i32 = arith.constant 0 : i32
    %c0_i32_0 = arith.constant 0 : i32
    return %arg0, %c0_i32 : i32, i32
  }
  func.func @transform_1(%arg0: i32) -> (i32, i32) {
    %c0_i32 = arith.constant 0 : i32
    %c0_i32_0 = arith.constant 0 : i32
    return %arg0, %c0_i32 : i32, i32
  }
  func.func @transform_2(%arg0: i32) -> (i32, i32) {
    %c0_i32 = arith.constant 0 : i32
    %c0_i32_0 = arith.constant 0 : i32
    %c0_i32_1 = arith.constant 0 : i32
    return %c0_i32, %c0_i32_0 : i32, i32
  }
  func.func @transform_3(%arg0: i32) -> (i32, i32) {
    %c0_i32 = arith.constant 0 : i32
    %c0_i32_0 = arith.constant 0 : i32
    %c0_i32_1 = arith.constant 0 : i32
    return %c0_i32, %c0_i32_0 : i32, i32
  }
  func.func @transform_4(%arg0: i32) -> (i32, i32) {
    %c0_i32 = arith.constant 0 : i32
    %c0_i32_0 = arith.constant 0 : i32
    %c0_i32_1 = arith.constant 0 : i32
    return %c0_i32, %c0_i32_0 : i32, i32
  }
  func.func @transform_5(%arg0: i32) -> (i32, i32) {
    %c0_i32 = arith.constant 0 : i32
    %c0_i32_0 = arith.constant 0 : i32
    %c0_i32_1 = arith.constant 0 : i32
    return %c0_i32, %c0_i32_0 : i32, i32
  }
  func.func @transform_6(%arg0: i32) -> (i32, i32) {
    %c0_i32 = arith.constant 0 : i32
    %c0_i32_0 = arith.constant 0 : i32
    return %arg0, %c0_i32 : i32, i32
  }
}

</mosaic_0001>

<llo_original>
// kernel: tpu_custom_call.1
$region0: #{tpu_custom_call.1}
  #allocation0 [shape = 'u32[]', space=smem, size = 0x4, offset = 0x4, fixed_abs, tag = 'smem constant byte address 0x4 - core index']
  #allocation1 [shape = 'u32[144,128]{1,0:T(1,128)}', space=vmem, size = 0x12000, scoped, tag = 'internal scratch']
  %s0 = inlined_call_operand.hbm [shape: f32[16,32], index: 0, kind: input, shape index: {}]
  %s1 = inlined_call_operand.hbm [shape: f32[16,32], index: 1, kind: input, shape index: {}]
  %s2 = inlined_call_operand.hbm [shape: f32[32,64], index: 2, kind: input, shape index: {}]
  %s3 = inlined_call_operand.vmem [shape: f32[1,64], index: 3, kind: input, shape index: {}]
  %s4 = inlined_call_operand.hbm [shape: f32[32,128], index: 4, kind: input, shape index: {}]
  %s5 = inlined_call_operand.vmem [shape: f32[1,128], index: 5, kind: input, shape index: {}]
  %s6 = inlined_call_operand.hbm [shape: f32[16,128], index: 6, kind: output, shape index: {}]
  %s7 = sld [smem:[#allocation0]]
  $region50: #{tpu_custom_call.1} parent=0
    _
  %s9 = ssub.s32 1, %s7
  %s10 = scalar_select 0, %s9, %s7
  $region1: #{tpu_custom_call.1} parent=0
    #allocation2 [shape = 'u8[8192]{0}', space=vmem, size = 0x2000, scoped, tag = 'input window, operand 0, single buffered']
    #allocation3 [shape = 's32[1]{0}', space=sflag, size = 0x4, scoped, tag = 'scoped memory for tpu_custom_call.1']
    #allocation4 [shape = 's32[1]{0}', space=sflag, size = 0x4, scoped, tag = 'scoped memory for tpu_custom_call.1']
    #allocation5 [shape = 'u8[8192]{0}', space=vmem, size = 0x2000, scoped, tag = 'input window, operand 1, single buffered']
    #allocation6 [shape = 's32[1]{0}', space=sflag, size = 0x4, scoped, tag = 'scoped memory for tpu_custom_call.1']
    #allocation7 [shape = 'u8[16384]{0}', space=vmem, size = 0x4000, scoped, tag = 'input window, operand 2, single buffered']
    #allocation8 [shape = 'u8[16384]{0}', space=vmem, size = 0x4000, scoped, tag = 'input window, operand 4, single buffered']
    #allocation9 [shape = 's32[1]{0}', space=sflag, size = 0x4, scoped, tag = 'scoped memory for tpu_custom_call.1']
    #allocation10 [shape = 'u8[8192]{0}', space=vmem, size = 0x2000, scoped, tag = 'output window, operand 0, single buffered']
    %11 = vsyncpa [#allocation3], 0
    %12 = vsyncpa [#allocation6], 0
    %13 = vsyncpa [#allocation9], 0
    %14 = vsyncpa [#allocation4], 0
    // Predicated region
    $region2: #{tpu_custom_call.1} parent=1 // pred_check
      _
    $region3: #{tpu_custom_call.1} parent=1 // pred_check_branch
      %16 = sbr.rel (0) target = $region5
    $region4: #{tpu_custom_call.1} parent=1 // pred_region
      %s18 = ssub.s32 256, 256
      %19 = vsyncadd [#allocation3], %s18
      %s20 = sshll.u32 [#allocation2], 4
      %s21 = int_to_ptr.vmem [resolvable:$true] %s20
      %26 = dma.hbm_to_vmem [thread:$0]  %s0, 256, %s21, [#allocation3], 128, 128, 8
    $region5: #{tpu_custom_call.1} parent=1 // pred_fallthru
      _
    // Predicated region
    $region6: #{tpu_custom_call.1} parent=1 // pred_check
      _
    $region7: #{tpu_custom_call.1} parent=1 // pred_check_branch
      %28 = sbr.rel (0) target = $region9
    $region8: #{tpu_custom_call.1} parent=1 // pred_region
      %s30 = ssub.s32 256, 256
      %31 = vsyncadd [#allocation6], %s30
      %s32 = sshll.u32 [#allocation5], 4
      %s33 = int_to_ptr.vmem [resolvable:$true] %s32
      %38 = dma.hbm_to_vmem [thread:$0]  %s1, 256, %s33, [#allocation6], 128, 128, 8
    $region9: #{tpu_custom_call.1} parent=1 // pred_fallthru
      _
    // Predicated region
    $region10: #{tpu_custom_call.1} parent=1 // pred_check
      _
    $region11: #{tpu_custom_call.1} parent=1 // pred_check_branch
      %40 = sbr.rel (0) target = $region13
    $region12: #{tpu_custom_call.1} parent=1 // pred_region
      %s42 = ssub.s32 512, 512
      %43 = vsyncadd [#allocation6], %s42
      %s44 = sshll.u32 [#allocation7], 4
      %s45 = int_to_ptr.vmem [resolvable:$true] %s44
      %50 = dma.hbm_to_vmem [thread:$0]  %s2, 512, %s45, [#allocation6], 128, 128, 8
    $region13: #{tpu_custom_call.1} parent=1 // pred_fallthru
      _
    // Predicated region
    $region14: #{tpu_custom_call.1} parent=1 // pred_check
      _
    $region15: #{tpu_custom_call.1} parent=1 // pred_check_branch
      %52 = sbr.rel (0) target = $region17
    $region16: #{tpu_custom_call.1} parent=1 // pred_region
      _
    $region17: #{tpu_custom_call.1} parent=1 // pred_fallthru
      _
    // Predicated region
    $region18: #{tpu_custom_call.1} parent=1 // pred_check
      _
    $region19: #{tpu_custom_call.1} parent=1 // pred_check_branch
      %54 = sbr.rel (0) target = $region21
    $region20: #{tpu_custom_call.1} parent=1 // pred_region
      %s56 = ssub.s32 512, 512
      %57 = vsyncadd [#allocation9], %s56
      %s58 = sshll.u32 [#allocation8], 4
      %s59 = int_to_ptr.vmem [resolvable:$true] %s58
      %64 = dma.hbm_to_vmem [thread:$0]  %s4, 512, %s59, [#allocation9], 128, 128, 8
    $region21: #{tpu_custom_call.1} parent=1 // pred_fallthru
      _
    // Predicated region
    $region22: #{tpu_custom_call.1} parent=1 // pred_check
      _
    $region23: #{tpu_custom_call.1} parent=1 // pred_check_branch
      %66 = sbr.rel (0) target = $region25
    $region24: #{tpu_custom_call.1} parent=1 // pred_region
      _
    $region25: #{tpu_custom_call.1} parent=1 // pred_fallthru
      _
    // Predicated region
    $region26: #{tpu_custom_call.1} parent=1 // pred_check
      _
    $region27: #{tpu_custom_call.1} parent=1 // pred_check_branch
      %68 = sbr.rel (0) target = $region29
    $region28: #{tpu_custom_call.1} parent=1 // pred_region
      %69 = dma.done [#allocation3], 256
    $region29: #{tpu_custom_call.1} parent=1 // pred_fallthru
      _
    // Predicated region
    $region30: #{tpu_custom_call.1} parent=1 // pred_check
      _
    $region31: #{tpu_custom_call.1} parent=1 // pred_check_branch
      %71 = sbr.rel (0) target = $region33
    $region32: #{tpu_custom_call.1} parent=1 // pred_region
      %72 = dma.done [#allocation6], 256
    $region33: #{tpu_custom_call.1} parent=1 // pred_fallthru
      _
    // Predicated region
    $region34: #{tpu_custom_call.1} parent=1 // pred_check
      _
    $region35: #{tpu_custom_call.1} parent=1 // pred_check_branch
      %74 = sbr.rel (0) target = $region37
    $region36: #{tpu_custom_call.1} parent=1 // pred_region
      %75 = dma.done [#allocation6], 512
    $region37: #{tpu_custom_call.1} parent=1 // pred_fallthru
      _
    // Predicated region
    $region38: #{tpu_custom_call.1} parent=1 // pred_check
      _
    $region39: #{tpu_custom_call.1} parent=1 // pred_check_branch
      %77 = sbr.rel (0) target = $region41
    $region40: #{tpu_custom_call.1} parent=1 // pred_region
      %78 = dma.done [#allocation9], 512
    $region41: #{tpu_custom_call.1} parent=1 // pred_fallthru
      _
    %v79 = vld [vmem:[#allocation5] sm:$0xff]
    %v80 = vld [vmem:[#allocation5 + $0x8] sm:$0xff]
    %v81 = vxor.u32 %v79, 2147483648
    %v82 = vxor.u32 %v80, 2147483648
    %v83 = vmul.f32 %v81, 1.442695
    %v84 = vpow.pop %v83
    %v85 = vmul.f32 %v82, 1.442695
    %v86 = vpow.pop %v85
    %v87 = vadd.f32 %v84, 1.0
    %v88 = vadd.f32 %v86, 1.0
    %v89 = vrcp.pop %v87
    %v90 = vmul.f32 1.0, %v89
    %v91 = vrcp.pop %v88
    %v92 = vmul.f32 1.0, %v91
    %v93 = vmul.f32 %v79, %v90
    %v94 = vmul.f32 %v80, %v92
    %v95 = vld [vmem:[#allocation7] sm:$0xff]
    %v96 = vld [vmem:[#allocation7 + $0x8] sm:$0xff]
    %v97 = vld [vmem:[#allocation7 + $0x10] sm:$0xff]
    %v98 = vld [vmem:[#allocation7 + $0x18] sm:$0xff]
    %v99 = vld [vmem:[%s3] sm:$0x1]
    %v101 = vlaneseq
    %v102 = vshrl.u32 %v101, 7
    %v103 = vsub.s32 0, %v102
    %v104 = vrot.slane %v99, %v103
    %vm106 = vcmask 261120
    %v108 = vsel %vm106, %v93, 0
    %v111 = vsel %vm106, %v94, 0
    %113 = vmatprep.subr.mxu0 0.0
    %114 = vmatpush1.msra.mxu0 0.0
    %115 = vmatprep.subr.mxu0 0.0
    %116 = vmatpush1.msra.mxu0 0.0
    %117 = vmatprep.subr.mxu0 0.0
    %118 = vmatpush1.msra.mxu0 0.0
    %119 = vmatprep.subr.mxu0 0.0
    %120 = vmatpush1.msra.mxu0 0.0
    %121 = vmatprep.subr.mxu0 0.0
    %122 = vmatpush1.msra.mxu0 0.0
    %123 = vmatprep.subr.mxu0 0.0
    %124 = vmatpush1.msra.mxu0 0.0
    %125 = vmatprep.subr.mxu0 0.0
    %126 = vmatpush1.msra.mxu0 0.0
    %127 = vmatprep.subr.mxu0 0.0
    %128 = vmatpush1.msra.mxu0 0.0
    %129 = vmatprep.subr.mxu0 0.0
    %130 = vmatpush1.msra.mxu0 0.0
    %131 = vmatprep.subr.mxu0 0.0
    %132 = vmatpush1.msra.mxu0 0.0
    %133 = vmatprep.subr.mxu0 0.0
    %134 = vmatpush1.msra.mxu0 0.0
    %135 = vmatprep.subr.mxu0 0.0
    %136 = vmatpush1.msra.mxu0 0.0
    %137 = vmatprep.subr.mxu0 0.0
    %138 = vmatpush1.msra.mxu0 %v98
    %139 = vmatprep.subr.mxu0 0.0
    %140 = vmatpush1.msra.mxu0 %v97
    %141 = vmatprep.subr.mxu0 0.0
    %142 = vmatpush1.msra.mxu0 %v96
    %143 = vmatprep.subr.mxu0 0.0
    %144 = vmatpush1.msra.mxu0 %v95
    %145 = vmatprep.subr.mxu0 0.0
    %146 = vmatpush2.msra.mxu0 0.0
    %147 = vmatprep.subr.mxu0 0.0
    %148 = vmatpush2.msra.mxu0 0.0
    %149 = vmatprep.subr.mxu0 0.0
    %150 = vmatpush2.msra.mxu0 0.0
    %151 = vmatprep.subr.mxu0 0.0
    %152 = vmatpush2.msra.mxu0 0.0
    %153 = vmatprep.subr.mxu0 0.0
    %154 = vmatpush2.msra.mxu0 0.0
    %155 = vmatprep.subr.mxu0 0.0
    %156 = vmatpush2.msra.mxu0 0.0
    %157 = vmatprep.subr.mxu0 0.0
    %158 = vmatpush2.msra.mxu0 0.0
    %159 = vmatprep.subr.mxu0 0.0
    %160 = vmatpush2.msra.mxu0 0.0
    %161 = vmatprep.subr.mxu0 0.0
    %162 = vmatpush2.msra.mxu0 0.0
    %163 = vmatprep.subr.mxu0 0.0
    %164 = vmatpush2.msra.mxu0 0.0
    %165 = vmatprep.subr.mxu0 0.0
    %166 = vmatpush2.msra.mxu0 0.0
    %167 = vmatprep.subr.mxu0 0.0
    %168 = vmatpush2.msra.mxu0 0.0
    %169 = vmatprep.subr.mxu0 0.0
    %170 = vmatpush2.msra.mxu0 0.0
    %171 = vmatprep.subr.mxu0 0.0
    %172 = vmatpush2.msra.mxu0 0.0
    %173 = vmatprep.subr.mxu0 0.0
    %174 = vmatpush2.msra.mxu0 0.0
    %175 = vmatprep.subr.mxu0 0.0
    %176 = vmatpush2.msra.mxu0 0.0
    %177 = vmatprep.mubr.f32.mxu0 0.0
    %178 = vmatmul.mubr.f32.gmra.mxu0 %v108
    %v179 = vpop.f32.mrf.mxu0
    %v180 = vadd.f32 %v104, %v179
    %v181 = vpop.f32.mrf.mxu0
    %182 = vmatprep.mubr.f32.mxu0 0.0
    %183 = vmatmul.mubr.f32.gmra.mxu0 %v111
    %v184 = vpop.f32.mrf.mxu0
    %v185 = vadd.f32 %v104, %v184
    %v186 = vpop.f32.mrf.mxu0
    %187 = vdwg.mxu0
    %v188 = vld [vmem:[#allocation2] sm:$0xff]
    %v189 = vld [vmem:[#allocation2 + $0x8] sm:$0xff]
    %v190 = vsel %vm106, %v188, 0.0
    %191 = vadd.xlane.f32.xlu0 %v190
    %v192 = vpop.xlane.xlu0 %191
    %v193 = vsel %vm106, %v189, 0.0
    %194 = vadd.xlane.f32.xlu0 %v193
    %v195 = vpop.xlane.xlu0 %194
    %v196 = vrcp.pop 32.0
    %v197 = vmul.f32 %v192, %v196
    %v198 = vmul.f32 %v195, %v196
    %v199 = vmul.f32 %v188, %v188
    %v200 = vmul.f32 %v189, %v189
    %v201 = vsel %vm106, %v199, 0.0
    %202 = vadd.xlane.f32.xlu0 %v201
    %v203 = vpop.xlane.xlu0 %202
    %v204 = vsel %vm106, %v200, 0.0
    %205 = vadd.xlane.f32.xlu0 %v204
    %v206 = vpop.xlane.xlu0 %205
    %v207 = vmul.f32 %v203, %v196
    %v208 = vmul.f32 %v206, %v196
    %v209 = vmul.f32 %v197, %v197
    %v210 = vmul.f32 %v198, %v198
    %v211 = vsub.f32 %v207, %v209
    %v212 = vsub.f32 %v208, %v210
    %v213 = vsub.f32 %v188, %v197
    %v214 = vsub.f32 %v189, %v198
    %v215 = vadd.f32 %v211, 1e-06
    %v216 = vadd.f32 %v212, 1e-06
    %v217 = vrsqrt.pop %v215
    %v218 = vrsqrt.pop %v216
    %v219 = vmul.f32 %v213, %v217
    %v220 = vmul.f32 %v214, %v218
    %223 = vrot.lane.b32.xlu0 %v180, 96
    %v224 = vpop.permute.xlu0 %223
    %225 = vrot.lane.b32.xlu0 %v185, 96
    %v226 = vpop.permute.xlu0 %225
    %v229 = vmul.f32 %v219, %v224
    %v230 = vmul.f32 %v220, %v226
    %v231 = vadd.f32 %v229, %v180
    %v232 = vadd.f32 %v230, %v185
    %v233 = vld [vmem:[#allocation8] sm:$0xff]
    %v234 = vld [vmem:[#allocation8 + $0x8] sm:$0xff]
    %v235 = vld [vmem:[#allocation8 + $0x10] sm:$0xff]
    %v236 = vld [vmem:[#allocation8 + $0x18] sm:$0xff]
    %v237 = vld [vmem:[%s5] sm:$0x1]
    %v239 = vlaneseq
    %v240 = vshrl.u32 %v239, 7
    %v241 = vsub.s32 0, %v240
    %v242 = vrot.slane %v237, %v241
    %v245 = vsel %vm106, %v231, 0
    %v248 = vsel %vm106, %v232, 0
    %250 = vmatprep.subr.mxu0 0.0
    %251 = vmatpush1.msra.mxu0 0.0
    %252 = vmatprep.subr.mxu0 0.0
    %253 = vmatpush1.msra.mxu0 0.0
    %254 = vmatprep.subr.mxu0 0.0
    %255 = vmatpush1.msra.mxu0 0.0
    %256 = vmatprep.subr.mxu0 0.0
    %257 = vmatpush1.msra.mxu0 0.0
    %258 = vmatprep.subr.mxu0 0.0
    %259 = vmatpush1.msra.mxu0 0.0
    %260 = vmatprep.subr.mxu0 0.0
    %261 = vmatpush1.msra.mxu0 0.0
    %262 = vmatprep.subr.mxu0 0.0
    %263 = vmatpush1.msra.mxu0 0.0
    %264 = vmatprep.subr.mxu0 0.0
    %265 = vmatpush1.msra.mxu0 0.0
    %266 = vmatprep.subr.mxu0 0.0
    %267 = vmatpush1.msra.mxu0 0.0
    %268 = vmatprep.subr.mxu0 0.0
    %269 = vmatpush1.msra.mxu0 0.0
    %270 = vmatprep.subr.mxu0 0.0
    %271 = vmatpush1.msra.mxu0 0.0
    %272 = vmatprep.subr.mxu0 0.0
    %273 = vmatpush1.msra.mxu0 0.0
    %274 = vmatprep.subr.mxu0 0.0
    %275 = vmatpush1.msra.mxu0 %v236
    %276 = vmatprep.subr.mxu0 0.0
    %277 = vmatpush1.msra.mxu0 %v235
    %278 = vmatprep.subr.mxu0 0.0
    %279 = vmatpush1.msra.mxu0 %v234
    %280 = vmatprep.subr.mxu0 0.0
    %281 = vmatpush1.msra.mxu0 %v233
    %282 = vmatprep.subr.mxu0 0.0
    %283 = vmatpush2.msra.mxu0 0.0
    %284 = vmatprep.subr.mxu0 0.0
    %285 = vmatpush2.msra.mxu0 0.0
    %286 = vmatprep.subr.mxu0 0.0
    %287 = vmatpush2.msra.mxu0 0.0
    %288 = vmatprep.subr.mxu0 0.0
    %289 = vmatpush2.msra.mxu0 0.0
    %290 = vmatprep.subr.mxu0 0.0
    %291 = vmatpush2.msra.mxu0 0.0
    %292 = vmatprep.subr.mxu0 0.0
    %293 = vmatpush2.msra.mxu0 0.0
    %294 = vmatprep.subr.mxu0 0.0
    %295 = vmatpush2.msra.mxu0 0.0
    %296 = vmatprep.subr.mxu0 0.0
    %297 = vmatpush2.msra.mxu0 0.0
    %298 = vmatprep.subr.mxu0 0.0
    %299 = vmatpush2.msra.mxu0 0.0
    %300 = vmatprep.subr.mxu0 0.0
    %301 = vmatpush2.msra.mxu0 0.0
    %302 = vmatprep.subr.mxu0 0.0
    %303 = vmatpush2.msra.mxu0 0.0
    %304 = vmatprep.subr.mxu0 0.0
    %305 = vmatpush2.msra.mxu0 0.0
    %306 = vmatprep.subr.mxu0 0.0
    %307 = vmatpush2.msra.mxu0 0.0
    %308 = vmatprep.subr.mxu0 0.0
    %309 = vmatpush2.msra.mxu0 0.0
    %310 = vmatprep.subr.mxu0 0.0
    %311 = vmatpush2.msra.mxu0 0.0
    %312 = vmatprep.subr.mxu0 0.0
    %313 = vmatpush2.msra.mxu0 0.0
    %314 = vmatprep.mubr.f32.mxu0 0.0
    %315 = vmatmul.mubr.f32.gmra.mxu0 %v245
    %v316 = vpop.f32.mrf.mxu0
    %v317 = vadd.f32 %v242, %v316
    %v318 = vpop.f32.mrf.mxu0
    %319 = vmatprep.mubr.f32.mxu0 0.0
    %320 = vmatmul.mubr.f32.gmra.mxu0 %v248
    %v321 = vpop.f32.mrf.mxu0
    %v322 = vadd.f32 %v242, %v321
    %v323 = vpop.f32.mrf.mxu0
    %324 = vdwg.mxu0
    %325 = vst [vmem:[#allocation10] sm:$0xff] %v317
    %326 = vst [vmem:[#allocation10 + $0x8] sm:$0xff] %v322
    // Predicated region
    $region42: #{tpu_custom_call.1} parent=1 // pred_check
      _
    $region43: #{tpu_custom_call.1} parent=1 // pred_check_branch
      %328 = sbr.rel (0) target = $region45
    $region44: #{tpu_custom_call.1} parent=1 // pred_region
      %s330 = ssub.s32 256, 256
      %331 = vsyncadd [#allocation4], %s330
      %s332 = sshll.u32 [#allocation10], 4
      %s333 = int_to_ptr.vmem [resolvable:$true] %s332
      %338 = dma.vmem_to_hbm [thread:$0]  %s333, 256, %s6, [#allocation4], 128, 128, 8
    $region45: #{tpu_custom_call.1} parent=1 // pred_fallthru
      _
    // Predicated region
    $region46: #{tpu_custom_call.1} parent=1 // pred_check
      _
    $region47: #{tpu_custom_call.1} parent=1 // pred_check_branch
      %340 = sbr.rel (0) target = $region49
    $region48: #{tpu_custom_call.1} parent=1 // pred_region
      %341 = dma.done [#allocation4], 256
    $region49: #{tpu_custom_call.1} parent=1 // pred_fallthru
      _
    %342 = vsyncpa [#allocation3], 1
    %343 = vsyncpa [#allocation6], 1
    %344 = vsyncpa [#allocation9], 1
    %345 = vsyncpa [#allocation4], 1

</llo_original>
